<compile_context>
chip_gen: v5e
topology: v5e:2x2
jax: 0.10.0
libtpu: 0.0.40
codegen_flags: <defaults>
</compile_context>

<pallas_src>
import numpy as np
import jax
import jax.numpy as jnp
from jax.experimental import pallas as pl
from jax.experimental.pallas import tpu as pltpu

REALSHAPE = (16, 16)   # must be even, n_d == 2
K_CUT = 4


def _round_up(x, m):
    return ((x + m - 1) // m) * m


# ----------------------------------------------------------------------------
# feed_ind / hermitian machinery (mirrors FourierLowK.__init__ for n_d == 2)
# ----------------------------------------------------------------------------
def _feed_ind_2d(realshape, k_cut):
    H, W = realshape
    Wh = W // 2 + 1
    mids = (H // 2, Wh - 1)
    kx = np.fft.fftfreq(H, 1.0 / H)
    ky = np.arange(Wh)
    KX, KY = np.meshgrid(kx, ky, indexing="ij")
    ksq = KX ** 2 + KY ** 2
    # positions overwritten by hermitian_symmetric are not independent
    same = np.ones((H, Wh), dtype=bool)
    same[mids[0] + 1:, 0] = False
    same[mids[0] + 1:, mids[1]] = False
    rem = same & (ksq <= k_cut ** 2)
    feed = np.stack([rem, rem])
    # imaginary part of the self-conjugate (purely real) modes is not fed
    feed[1, 0, 0] = False
    feed[1, mids[0], 0] = False
    feed[1, 0, mids[1]] = False
    feed[1, mids[0], mids[1]] = False
    return feed, mids


def _hermitian_symmetric_2d(f, mids):
    """JAX version of FourierLowK.hermitian_symmetric for n_d == 2 (batched)."""
    m0, m1 = mids
    f = f.at[..., m0 + 1:, 0].set(jnp.flip(f[..., 1:m0, 0], axis=-1).conj())
    f = f.at[..., m0 + 1:, m1].set(jnp.flip(f[..., 1:m0, m1], axis=-1).conj())
    return f


def _build_basis(realshape, k_cut, basis_dtype=jnp.float32):
    """Exact linear map, with scale folded in and both axes padded for TPU.

    Returns:
      basis : (K_pad, N_pad) with K_pad = round_up(dim, 128) (lane-dense MXU
              depth) and N_pad = round_up(H*W, 128) (lane-dense output).
              Padded rows/cols are zero (inert).
      idx   : row-major flat indices of the fed coefficients.
      mids, dim
    """
    H, W = realshape
    Wh = W // 2 + 1
    feed, mids = _feed_ind_2d(realshape, k_cut)
    # row-major True positions == order torch uses for arr[:, feed_ind] = x
    idx = np.nonzero(feed.reshape(-1))[0]
    dim = idx.size
    arr = np.zeros((dim, 2 * H * Wh), dtype=np.float32)
    arr[np.arange(dim), idx] = 1.0
    arr = arr.reshape(dim, 2, H, Wh)
    comp = (arr[:, 0] + 1j * arr[:, 1]).astype(np.complex64)
    comp = _hermitian_symmetric_2d(jnp.asarray(comp), mids)
    basis = jnp.fft.irfftn(comp, s=realshape, axes=(-2, -1))
    basis = jnp.asarray(basis, jnp.float32).reshape(dim, H * W)
    # fold the x * scale multiply into the constant basis
    basis = basis * jnp.float32(np.prod(realshape))
    n = H * W
    d_pad = _round_up(dim, 128)   # lane-dense K for x and full MXU depth
    n_pad = _round_up(n, 128)     # lane-dense output columns
    basis = jnp.pad(basis, ((0, d_pad - dim), (0, n_pad - n)))
    return basis.astype(basis_dtype), idx, mids, dim


# ----------------------------------------------------------------------------
# Pallas kernel: out[M, N] = x[M, K] @ B[K, N]   (scale pre-folded into B)
# ----------------------------------------------------------------------------
def _fourier_lowk_kernel(x_ref, b_ref, o_ref):
    o_ref[...] = jnp.dot(x_ref[...], b_ref[...],
                         preferred_element_type=jnp.float32)


def _pick_tile(total, pref, quantum):
    """Largest divisor of `total` that is a multiple of `quantum` and
    <= max(pref, quantum).  `total` must be a multiple of `quantum`."""
    if total <= pref:
        return total
    t = max((pref // quantum) * quantum, quantum)
    while t > quantum and total % t != 0:
        t -= quantum
    return t


def fourier_lowk_forward(x, basis, realshape):
    """x: (b, c, dim) f32 coefficients -> (b, c, H, W) field.

    For tiny (b*c) the call is launch-overhead bound; batch many forwards
    into one call (any b, c works, the wrapper flattens to M = b*c)."""
    b, c, d = x.shape
    H, W = realshape
    N = H * W
    d_pad, n_pad = basis.shape
    M = b * c
    m_pad = _round_up(M, 8)

    x2 = x.reshape(M, d).astype(jnp.float32)
    x2 = jnp.pad(x2, ((0, m_pad - M), (0, d_pad - d)))

    basis_bytes = int(basis.dtype.itemsize)
    working = (m_pad * d_pad * 4) + (d_pad * n_pad * basis_bytes) + (m_pad * n_pad * 4)

    if working <= (2 << 20):
        # Tiny problem: single block, no grid, whole working set in VMEM.
        out = pl.pallas_call(
            _fourier_lowk_kernel,
            out_shape=jax.ShapeDtypeStruct((m_pad, n_pad), jnp.float32),
        )(x2, basis)
    else:
        # MXU-row-sized M tiles (512 = 2 x 256 MXU rows on v6e/v7x, 4 x 128 on
        # v5e), wide lane-dense N tiles.
        tm = _pick_tile(m_pad, 512, 8)
        tn = _pick_tile(n_pad, 2048, 128)

        def vmem_bytes(tm_, tn_):
            # double-buffered x tile + B tile + out tile
            return 2 * (tm_ * d_pad * 4 + d_pad * tn_ * basis_bytes + tm_ * tn_ * 4)

        # Stay under v5e's 16 MiB scoped-VMEM default (also safe on v7x 64 MiB).
        while vmem_bytes(tm, tn) > (12 << 20) and tn > 128:
            tn = _pick_tile(n_pad, tn // 2, 128)
        while vmem_bytes(tm, tn) > (12 << 20) and tm > 8:
            tm = _pick_tile(m_pad, tm // 2, 8)

        # Keep >= 2 parallel grid steps so v7x can shard across both TensorCores.
        if (n_pad // tn == 1) and (m_pad // tm == 1):
            if n_pad >= 256:
                tn = _pick_tile(n_pad, n_pad // 2, 128)
            elif m_pad >= 16:
                tm = _pick_tile(m_pad, m_pad // 2, 8)

        out = pl.pallas_call(
            _fourier_lowk_kernel,
            out_shape=jax.ShapeDtypeStruct((m_pad, n_pad), jnp.float32),
            # N outer, M inner: the B block index depends only on the outer
            # axis, so the basis is DMA'd once per N tile (x streams instead).
            grid=(n_pad // tn, m_pad // tm),
            in_specs=[
                pl.BlockSpec((tm, d_pad), lambda n_i, m_i: (m_i, 0)),
                pl.BlockSpec((d_pad, tn), lambda n_i, m_i: (0, n_i)),
            ],
            out_specs=pl.BlockSpec((tm, tn), lambda n_i, m_i: (m_i, n_i)),
            compiler_params=pltpu.CompilerParams(
                dimension_semantics=("parallel", "parallel")),
        )(x2, basis)

    return out[:M, :N].reshape(b, c, H, W)


# ----------------------------------------------------------------------------
if __name__ == "__main__":
    H, W = REALSHAPE
    Wh = W // 2 + 1

    basis_f32, idx, mids, dim = _build_basis(REALSHAPE, K_CUT, jnp.float32)

    def reference(x):
        """Pure-JAX mirror of the torch forward (scatter -> hermitian -> irfftn)."""
        b_, c_, _ = x.shape
        scale = float(np.prod(REALSHAPE))
        x2 = x.reshape(b_ * c_, dim) * scale
        arr = jnp.zeros((b_ * c_, 2 * H * Wh), jnp.float32).at[:, idx].set(x2)
        arr = arr.reshape(b_ * c_, 2, H, Wh)
        comp = (arr[:, 0] + 1j * arr[:, 1]).astype(jnp.complex64)
        comp = _hermitian_symmetric_2d(comp, mids)
        return jnp.fft.irfftn(comp, s=REALSHAPE, axes=(-2, -1)).reshape(b_, c_, H, W)

    key = jax.random.PRNGKey(0)
    k_small, k_big = jax.random.split(key)

    # ---- shipped small shape (single-block path) ---------------------------
    b, c = 2, 4
    x_small = jax.random.normal(k_small, (b, c, dim), dtype=jnp.float32)
    out = jax.block_until_ready(fourier_lowk_forward(x_small, basis_f32, REALSHAPE))
    ref = reference(x_small)
    assert out.shape == (b, c, H, W)
    np.testing.assert_allclose(np.asarray(out), np.asarray(ref), rtol=1e-3, atol=1e-3)

    # ---- larger batched call (tiled path; B streamed once per N tile) ------
    b2, c2 = 16, 128
    x_big = jax.random.normal(k_big, (b2, c2, dim), dtype=jnp.float32)
    out_big = jax.block_until_ready(fourier_lowk_forward(x_big, basis_f32, REALSHAPE))
    ref_big = reference(x_big)
    np.testing.assert_allclose(np.asarray(out_big), np.asarray(ref_big),
                               rtol=1e-3, atol=1e-3)

    # ---- bf16 basis option (halves dominant HBM traffic of streaming B) ----
    basis_bf16, _, _, _ = _build_basis(REALSHAPE, K_CUT, jnp.bfloat16)
    out_bf16 = jax.block_until_ready(fourier_lowk_forward(x_big, basis_bf16, REALSHAPE))
    rel = (np.linalg.norm(np.asarray(out_bf16) - np.asarray(ref_big))
           / np.linalg.norm(np.asarray(ref_big)))
    assert rel < 1e-2, f"bf16-basis relative L2 error too high: {rel}"

    print("KERNEL_OK")
</pallas_src>

<mosaic_0001>
module attributes {stable_mosaic.version = 11 : i64} {
  func.func @_fourier_lowk_kernel(%arg0: memref<8x128xf32, #tpu.memory_space<vmem>>, %arg1: memref<128x256xf32, #tpu.memory_space<vmem>>, %arg2: memref<8x256xf32, #tpu.memory_space<vmem>>) attributes {dimension_semantics = [], scalar_prefetch = 0 : i64, scratch_operands = 0 : i64, tpu.core_type = #tpu.core_type<tc>} {
    %c0 = arith.constant 0 : index
    %c0_0 = arith.constant 0 : index
    %0 = vector.load %arg0[%c0, %c0_0] : memref<8x128xf32, #tpu.memory_space<vmem>>, vector<8x128xf32>
    %c0_1 = arith.constant 0 : index
    %c0_2 = arith.constant 0 : index
    %1 = vector.load %arg1[%c0_1, %c0_2] : memref<128x256xf32, #tpu.memory_space<vmem>>, vector<128x256xf32>
    %cst = arith.constant dense<0.000000e+00> : vector<8x256xf32>
    %2 = tpu.matmul %0, %1, %cst {dimension_numbers = #tpu.dot_dimension_numbers<[1], [0], [0], [1], [0, 0, 1, 1], [], []>} : vector<8x128xf32>, vector<128x256xf32>, vector<8x256xf32> -> vector<8x256xf32>
    %c0_3 = arith.constant 0 : index
    %c0_4 = arith.constant 0 : index
    %3 = vector.load %arg2[%c0_3, %c0_4] : memref<8x256xf32, #tpu.memory_space<vmem>>, vector<8x256xf32>
    tpu.vector_store %arg2[%c0_3, %c0_4], %2 {strides = array<i32>} : memref<8x256xf32, #tpu.memory_space<vmem>>, vector<8x256xf32>,
    return
  }
}

</mosaic_0001>

<llo_original>
// kernel: tpu_custom_call.1
$region0: #{tpu_custom_call.1}
  #allocation0 [shape = 'u32[]', space=smem, size = 0x4, offset = 0x4, fixed_abs, tag = 'smem constant byte address 0x4 - core index']
  #allocation1 [shape = 'u32[72,128]{1,0:T(1,128)}', space=vmem, size = 0x9000, scoped, tag = 'internal scratch']
  %s0 = inlined_call_operand.hbm [shape: f32[8,128], index: 0, kind: input, shape index: {}]
  %s1 = inlined_call_operand.hbm [shape: f32[128,256], index: 1, kind: input, shape index: {}]
  %s2 = inlined_call_operand.hbm [shape: f32[8,256], index: 2, kind: output, shape index: {}]
  %s3 = sld [smem:[#allocation0]]
  $region26: #{tpu_custom_call.1} parent=0
    _
  %s5 = ssub.s32 1, %s3
  %s6 = scalar_select 0, %s5, %s3
  $region1: #{tpu_custom_call.1} parent=0
    #allocation2 [shape = 'u8[4096]{0}', space=vmem, size = 0x1000, scoped, tag = 'input window, operand 0, single buffered']
    #allocation3 [shape = 's32[1]{0}', space=sflag, size = 0x4, scoped, tag = 'scoped memory for tpu_custom_call.1']
    #allocation4 [shape = 's32[1]{0}', space=sflag, size = 0x4, scoped, tag = 'scoped memory for tpu_custom_call.1']
    #allocation5 [shape = 'u8[131072]{0}', space=vmem, size = 0x20000, scoped, tag = 'input window, operand 1, single buffered']
    #allocation6 [shape = 's32[1]{0}', space=sflag, size = 0x4, scoped, tag = 'scoped memory for tpu_custom_call.1']
    #allocation7 [shape = 'u8[8192]{0}', space=vmem, size = 0x2000, scoped, tag = 'output window, operand 0, single buffered']
    %7 = vsyncpa [#allocation3], 0
    %8 = vsyncpa [#allocation6], 0
    %9 = vsyncpa [#allocation4], 0
    // Predicated region
    $region2: #{tpu_custom_call.1} parent=1 // pred_check
      _
    $region3: #{tpu_custom_call.1} parent=1 // pred_check_branch
      %11 = sbr.rel (0) target = $region5
    $region4: #{tpu_custom_call.1} parent=1 // pred_region
      %13 = vsyncadd [#allocation3], 0
      %s15 = sshll.u32 %s0, 4
      %s16 = int_to_ptr.hbm [resolvable:$true] %s15
      %s17 = sshll.u32 [#allocation2], 4
      %s18 = int_to_ptr.vmem [resolvable:$true] %s17
      %20 = dma.hbm_to_vmem [thread:$0]  %s16, 128, %s18, [#allocation3]
    $region5: #{tpu_custom_call.1} parent=1 // pred_fallthru
      _
    // Predicated region
    $region6: #{tpu_custom_call.1} parent=1 // pred_check
      _
    $region7: #{tpu_custom_call.1} parent=1 // pred_check_branch
      %22 = sbr.rel (0) target = $region9
    $region8: #{tpu_custom_call.1} parent=1 // pred_region
      %24 = vsyncadd [#allocation6], 0
      %s25 = sshll.u32 %s1, 4
      %s26 = int_to_ptr.hbm [resolvable:$true] %s25
      %s27 = sshll.u32 [#allocation5], 4
      %s28 = int_to_ptr.vmem [resolvable:$true] %s27
      %33 = dma.hbm_to_vmem [thread:$0]  %s26, 4096, %s28, [#allocation6], 256, 256, 16
    $region9: #{tpu_custom_call.1} parent=1 // pred_fallthru
      _
    // Predicated region
    $region10: #{tpu_custom_call.1} parent=1 // pred_check
      _
    $region11: #{tpu_custom_call.1} parent=1 // pred_check_branch
      %35 = sbr.rel (0) target = $region13
    $region12: #{tpu_custom_call.1} parent=1 // pred_region
      %37 = dma.done [#allocation3], 128
    $region13: #{tpu_custom_call.1} parent=1 // pred_fallthru
      _
    // Predicated region
    $region14: #{tpu_custom_call.1} parent=1 // pred_check
      _
    $region15: #{tpu_custom_call.1} parent=1 // pred_check_branch
      %39 = sbr.rel (0) target = $region17
    $region16: #{tpu_custom_call.1} parent=1 // pred_region
      %41 = dma.done [#allocation6], 4096
    $region17: #{tpu_custom_call.1} parent=1 // pred_fallthru
      _
    %v42 = vld [vmem:[#allocation2] sm:$0xff]
    %v43 = vld [vmem:[#allocation5] sm:$0xff]
    %v44 = vld [vmem:[#allocation5 + $0x8] sm:$0xff]
    %v45 = vld [vmem:[#allocation5 + $0x10] sm:$0xff]
    %v46 = vld [vmem:[#allocation5 + $0x18] sm:$0xff]
    %v47 = vld [vmem:[#allocation5 + $0x20] sm:$0xff]
    %v48 = vld [vmem:[#allocation5 + $0x28] sm:$0xff]
    %v49 = vld [vmem:[#allocation5 + $0x30] sm:$0xff]
    %v50 = vld [vmem:[#allocation5 + $0x38] sm:$0xff]
    %v51 = vld [vmem:[#allocation5 + $0x40] sm:$0xff]
    %v52 = vld [vmem:[#allocation5 + $0x48] sm:$0xff]
    %v53 = vld [vmem:[#allocation5 + $0x50] sm:$0xff]
    %v54 = vld [vmem:[#allocation5 + $0x58] sm:$0xff]
    %v55 = vld [vmem:[#allocation5 + $0x60] sm:$0xff]
    %v56 = vld [vmem:[#allocation5 + $0x68] sm:$0xff]
    %v57 = vld [vmem:[#allocation5 + $0x70] sm:$0xff]
    %v58 = vld [vmem:[#allocation5 + $0x78] sm:$0xff]
    %v59 = vld [vmem:[#allocation5 + $0x80] sm:$0xff]
    %v60 = vld [vmem:[#allocation5 + $0x88] sm:$0xff]
    %v61 = vld [vmem:[#allocation5 + $0x90] sm:$0xff]
    %v62 = vld [vmem:[#allocation5 + $0x98] sm:$0xff]
    %v63 = vld [vmem:[#allocation5 + $0xa0] sm:$0xff]
    %v64 = vld [vmem:[#allocation5 + $0xa8] sm:$0xff]
    %v65 = vld [vmem:[#allocation5 + $0xb0] sm:$0xff]
    %v66 = vld [vmem:[#allocation5 + $0xb8] sm:$0xff]
    %v67 = vld [vmem:[#allocation5 + $0xc0] sm:$0xff]
    %v68 = vld [vmem:[#allocation5 + $0xc8] sm:$0xff]
    %v69 = vld [vmem:[#allocation5 + $0xd0] sm:$0xff]
    %v70 = vld [vmem:[#allocation5 + $0xd8] sm:$0xff]
    %v71 = vld [vmem:[#allocation5 + $0xe0] sm:$0xff]
    %v72 = vld [vmem:[#allocation5 + $0xe8] sm:$0xff]
    %v73 = vld [vmem:[#allocation5 + $0xf0] sm:$0xff]
    %v74 = vld [vmem:[#allocation5 + $0xf8] sm:$0xff]
    %75 = vmatpush.msra.mxu0 %v73
    %76 = vmatpush.msra.mxu0 %v71
    %77 = vmatpush.msra.mxu0 %v69
    %78 = vmatpush.msra.mxu0 %v67
    %79 = vmatpush.msra.mxu0 %v65
    %80 = vmatpush.msra.mxu0 %v63
    %81 = vmatpush.msra.mxu0 %v61
    %82 = vmatpush.msra.mxu0 %v59
    %83 = vmatpush.msra.mxu0 %v57
    %84 = vmatpush.msra.mxu0 %v55
    %85 = vmatpush.msra.mxu0 %v53
    %86 = vmatpush.msra.mxu0 %v51
    %87 = vmatpush.msra.mxu0 %v49
    %88 = vmatpush.msra.mxu0 %v47
    %89 = vmatpush.msra.mxu0 %v45
    %90 = vmatpush.msra.mxu0 %v43
    %91 = vmatmul.f32.gmra.mxu0 %v42
    %v92 = vpop.f32.mrf.mxu0
    %v93 = vadd.f32 0.0, %v92
    %94 = vdwg.mxu0
    %95 = vmatpush.msra.mxu0 %v74
    %96 = vmatpush.msra.mxu0 %v72
    %97 = vmatpush.msra.mxu0 %v70
    %98 = vmatpush.msra.mxu0 %v68
    %99 = vmatpush.msra.mxu0 %v66
    %100 = vmatpush.msra.mxu0 %v64
    %101 = vmatpush.msra.mxu0 %v62
    %102 = vmatpush.msra.mxu0 %v60
    %103 = vmatpush.msra.mxu0 %v58
    %104 = vmatpush.msra.mxu0 %v56
    %105 = vmatpush.msra.mxu0 %v54
    %106 = vmatpush.msra.mxu0 %v52
    %107 = vmatpush.msra.mxu0 %v50
    %108 = vmatpush.msra.mxu0 %v48
    %109 = vmatpush.msra.mxu0 %v46
    %110 = vmatpush.msra.mxu0 %v44
    %111 = vmatmul.f32.gmra.mxu0 %v42
    %v112 = vpop.f32.mrf.mxu0
    %v113 = vadd.f32 0.0, %v112
    %114 = vdwg.mxu0
    %115 = vst [vmem:[#allocation7] sm:$0xff] %v93
    %116 = vst [vmem:[#allocation7 + $0x8] sm:$0xff] %v113
    // Predicated region
    $region18: #{tpu_custom_call.1} parent=1 // pred_check
      _
    $region19: #{tpu_custom_call.1} parent=1 // pred_check_branch
      %118 = sbr.rel (0) target = $region21
    $region20: #{tpu_custom_call.1} parent=1 // pred_region
      %120 = vsyncadd [#allocation4], 0
      %s122 = sshll.u32 [#allocation7], 4
      %s123 = int_to_ptr.vmem [resolvable:$true] %s122
      %s124 = sshll.u32 %s2, 4
      %s125 = int_to_ptr.hbm [resolvable:$true] %s124
      %127 = dma.vmem_to_hbm [thread:$0]  %s123, 256, %s125, [#allocation4]
    $region21: #{tpu_custom_call.1} parent=1 // pred_fallthru
      _
    // Predicated region
    $region22: #{tpu_custom_call.1} parent=1 // pred_check
      _
    $region23: #{tpu_custom_call.1} parent=1 // pred_check_branch
      %129 = sbr.rel (0) target = $region25
    $region24: #{tpu_custom_call.1} parent=1 // pred_region
      %131 = dma.done [#allocation4], 256
    $region25: #{tpu_custom_call.1} parent=1 // pred_fallthru
      _
    %132 = vsyncpa [#allocation3], 1
    %133 = vsyncpa [#allocation6], 1
    %134 = vsyncpa [#allocation4], 1

</llo_original>
